<compile_context>
chip_gen: v6e
topology: v6e:2x2x1
jax: 0.10.0
libtpu: 0.0.40
codegen_flags: <defaults>
</compile_context>

<pallas_src>
import math

import numpy as np

import jax
import jax.numpy as jnp
from jax.experimental import pallas as pl
from jax.experimental.pallas import tpu as pltpu

_MIB = 1024 * 1024


def _round_up(x, m):
    return ((x + m - 1) // m) * m


def _vmem_capacity_bytes():
    """Physical VMEM per TensorCore; conservative 64 MiB (v7x) if unknown."""
    try:
        info = pltpu.get_tpu_info()
        cap = getattr(info, "vmem_capacity_bytes", None)
        if cap:
            return int(cap)
    except Exception:
        pass
    return 64 * _MIB


# ---------------------------------------------------------------------------
# Plain-JAX glue: Laplacian + Chebyshev polynomial basis (mirrors the module)
# ---------------------------------------------------------------------------
def get_laplacian(graph, normalize=True):
    """graph: [N, N] adjacency (no self loops). Returns [N, N] laplacian."""
    n = graph.shape[0]
    if normalize:
        deg = jnp.sum(graph, axis=-1)
        # Guard isolated (zero-degree) nodes against inf/NaN.
        d = jnp.where(deg > 0, deg ** (-0.5), 0.0)
        D = jnp.diag(d)
        L = jnp.eye(n, dtype=graph.dtype) - D @ graph @ D
    else:
        L = jnp.diag(jnp.sum(graph, axis=-1)) - graph
    return L


def cheb_polynomial_list(laplacian, k_orders):
    """laplacian: [N, N]. Returns list of k_orders [N, N] f32 Chebyshev polys."""
    n = laplacian.shape[0]
    L = laplacian.astype(jnp.float32)
    polys = [jnp.eye(n, dtype=jnp.float32)]
    if k_orders > 1:
        polys.append(L)
    for _ in range(2, k_orders):
        polys.append(2.0 * (L @ polys[-1]) - polys[-2])
    return polys[:k_orders]


# ---------------------------------------------------------------------------
# Pallas kernel: one deep matmul per row tile
#   lhs_ref: [TN, (K+1)*N]   bf16  packed Chebyshev basis row slab (streamed)
#   rhs_ref: [(K+1)*N, BDp]  bf16  batch-packed projected features (VMEM resident)
#   b_ref:   [1, BDp]        f32   batch-tiled bias (VMEM resident)
#   o_ref:   [TN, BDp]             batch-packed output rows (written once)
# ---------------------------------------------------------------------------
def cheb_conv_kernel(lhs_ref, rhs_ref, b_ref, o_ref):
    acc = jnp.dot(lhs_ref[...], rhs_ref[...], preferred_element_type=jnp.float32)
    o_ref[...] = (acc + b_ref[...]).astype(o_ref.dtype)


def cheb_conv(x, graph, weight, bias=None, normalize=True, row_tile=None,
              out_dtype=jnp.float32):
    """
    x:      [B, N, C] float
    graph:  [N, N]    float adjacency (no self loops)
    weight: [K+1, 1, C, D]  (PyTorch parameter shape)
    bias:   [1, 1, D] or None
    returns [B, N, D] out_dtype
    """
    B, N, C = x.shape
    Kp1 = weight.shape[0]
    D = weight.shape[-1]
    f32 = jnp.float32

    BD = B * D
    BD_pad = _round_up(BD, 128)       # lane-dense packed output width
    KN = Kp1 * N                       # depth of the single fused contraction

    # ---- plain-JAX prep (mirrors the PyTorch module) ------------------------
    L = get_laplacian(graph.astype(f32), normalize)
    polys = cheb_polynomial_list(L, Kp1)                 # K+1 x [N, N] f32
    # Packed basis: lhs[n, k*N + m] = T_k[n, m]; cast each order to bf16 as it
    # is packed (no extra materialized f32 [K,N,N] -> fewer prep HBM bytes).
    # TODO(synk): cache `lhs` across calls when the graph is static.
    lhs = jnp.concatenate([p.astype(jnp.bfloat16) for p in polys], axis=1)  # [N, KN]

    # Batch packed into lanes: rhs[k*N + m, b*D + d] = (x[b] @ W[k])[m, d]
    xt = jnp.transpose(x.astype(f32), (1, 0, 2))         # [N, B, C]
    w_kcd = weight.reshape(Kp1, C, D).astype(f32)        # [K+1, C, D]
    rhs = jnp.einsum("nbc,kcd->knbd", xt, w_kcd).reshape(KN, BD)
    if bias is None:
        bias_packed = jnp.zeros((1, BD), dtype=f32)
    else:
        bias_packed = jnp.tile(bias.reshape(1, D).astype(f32), (1, B))   # [1, B*D]
    if BD_pad != BD:
        rhs = jnp.pad(rhs, ((0, 0), (0, BD_pad - BD)))
        bias_packed = jnp.pad(bias_packed, ((0, 0), (0, BD_pad - BD)))
    rhs = rhs.astype(jnp.bfloat16)

    # ---- generation-aware VMEM budget & row tiling ---------------------------
    # Leave >=16 MiB headroom for compiler scratch; never ask for the full
    # physical VMEM (64 MiB on v7x), cap at 112 MiB (v5e/v6e have 128 MiB).
    vmem_limit = max(32 * _MIB, min(_vmem_capacity_bytes() - 16 * _MIB, 112 * _MIB))
    out_itemsize = np.dtype(out_dtype).itemsize

    def vmem_estimate(rt):
        return (2 * rt * KN * 2              # streamed basis slab, dbl-buffered bf16
                + KN * BD_pad * 2            # rhs, single-buffered bf16
                + BD_pad * 4                 # bias, single-buffered f32
                + 2 * rt * BD_pad * out_itemsize)   # output, dbl-buffered

    if row_tile is None:
        # 512 only when the budget is roomy (v5e/v6e 128 MiB VMEM); 256 otherwise.
        row_tile = 512 if vmem_limit >= 96 * _MIB else 256
        while row_tile > 16 and vmem_estimate(row_tile) > 0.85 * vmem_limit:
            row_tile //= 2
        # Keep >= 2 row tiles where possible so the "parallel" axis shards
        # across both v7x TensorCores and DMA/compute actually overlap.
        two_tiles = _round_up(max(_round_up(N, 16) // 2, 16), 16)
        row_tile = min(row_tile, two_tiles)
    row_tile = max(16, _round_up(row_tile, 16))          # bf16 sublane packing

    # Pad N up to a tile multiple instead of collapsing to one full-N tile.
    N_pad = _round_up(N, row_tile)
    if N_pad != N:
        lhs = jnp.pad(lhs, ((0, N_pad - N), (0, 0)))
    grid_r = N_pad // row_tile

    def _call(single_buffer_invariants):
        mode = pl.Buffered(1) if single_buffer_invariants else None
        return pl.pallas_call(
            cheb_conv_kernel,
            out_shape=jax.ShapeDtypeStruct((N_pad, BD_pad), out_dtype),
            grid_spec=pltpu.PrefetchScalarGridSpec(
                num_scalar_prefetch=0,
                grid=(grid_r,),
                in_specs=[
                    # basis row slab: streamed from HBM exactly once overall
                    pl.BlockSpec((row_tile, KN), lambda r: (r, 0)),
                    # projected features: grid-invariant -> VMEM resident
                    pl.BlockSpec((KN, BD_pad), lambda r: (0, 0),
                                 pipeline_mode=mode),
                    # bias: grid-invariant -> VMEM resident
                    pl.BlockSpec((1, BD_pad), lambda r: (0, 0),
                                 pipeline_mode=mode),
                ],
                out_specs=pl.BlockSpec((row_tile, BD_pad), lambda r: (r, 0)),
            ),
            compiler_params=pltpu.CompilerParams(
                dimension_semantics=("parallel",),
                vmem_limit_bytes=int(vmem_limit)),
        )(lhs, rhs, bias_packed)

    try:
        out_packed = _call(True)
    except Exception:
        # Older runtimes without single-buffer pipeline_mode support: fall back
        # to default double buffering (correctness identical, slightly more VMEM).
        out_packed = _call(False)

    # Unpack lanes back to [B, N, D].
    out = out_packed[:N, :BD].reshape(N, B, D)
    return jnp.transpose(out, (1, 0, 2))


# ---------------------------------------------------------------------------
# Deterministic parameter init (matches nn.Parameter shapes + xavier_normal_)
# ---------------------------------------------------------------------------
def init_params(key, in_c, out_c, K):
    kp1 = K + 1
    fan_in = 1 * in_c * out_c
    fan_out = kp1 * in_c * out_c
    std = math.sqrt(2.0 / (fan_in + fan_out))
    weight = std * jax.random.normal(key, (kp1, 1, in_c, out_c), dtype=jnp.float32)
    bias = jnp.zeros((1, 1, out_c), dtype=jnp.float32)
    return weight, bias


def reference_forward(x, graph, weight, bias, normalize=True):
    """Pure-JAX f32 reference mirroring the PyTorch forward."""
    Kp1 = weight.shape[0]
    L = get_laplacian(graph.astype(jnp.float32), normalize)
    mul_L = jnp.stack(cheb_polynomial_list(L, Kp1))[:, None]   # [K+1, 1, N, N]
    result = jnp.matmul(mul_L, x.astype(jnp.float32))          # [K+1, B, N, C]
    result = jnp.matmul(result, weight.astype(jnp.float32))    # [K+1, B, N, D]
    out = jnp.sum(result, axis=0)                              # [B, N, D]
    if bias is not None:
        out = out + bias.astype(jnp.float32)
    return out


if __name__ == "__main__":
    B, N, C, D, K = 2, 32, 4, 8, 2   # K=2 -> 3 Chebyshev orders

    key = jax.random.PRNGKey(0)
    k_x, k_g, k_w = jax.random.split(key, 3)

    x = jax.random.normal(k_x, (B, N, C), dtype=jnp.float32)
    # symmetric non-negative adjacency without self loops
    g = jax.random.uniform(k_g, (N, N), dtype=jnp.float32, minval=0.1, maxval=1.0)
    graph = 0.5 * (g + g.T) * (1.0 - jnp.eye(N, dtype=jnp.float32))

    weight, bias = init_params(k_w, C, D, K)

    # Auto tiling picks row_tile=16 -> grid of 2 parallel row tiles at N=32.
    out = cheb_conv(x, graph, weight, bias, normalize=True)
    out = jax.block_until_ready(out)

    ref = reference_forward(x, graph, weight, bias, normalize=True)
    assert out.shape == (B, N, D)
    # bf16 MXU inputs (f32 accumulation) -> loosened tolerance vs f32 reference.
    max_err = float(jnp.max(jnp.abs(out - ref)))
    assert max_err < 5e-2, f"mismatch vs reference, max abs err = {max_err}"

    print("KERNEL_OK")
</pallas_src>

<mosaic_0001>
module attributes {stable_mosaic.version = 11 : i64} {
  func.func @cheb_conv_kernel(%arg0: i32, %arg1: memref<16x96xbf16, #tpu.memory_space<vmem>>, %arg2: memref<96x128xbf16, #tpu.memory_space<vmem>>, %arg3: memref<1x128xf32, #tpu.memory_space<vmem>>, %arg4: memref<16x128xf32, #tpu.memory_space<vmem>>) attributes {dimension_semantics = [#tpu.dimension_semantics<parallel>], iteration_bounds = array<i64: 2>, scalar_prefetch = 0 : i64, scratch_operands = 0 : i64, tpu.core_type = #tpu.core_type<tc>, window_params = [{transform_indices = @transform_0, window_bounds = array<i64: 16, 96>}, {pipeline_mode = #tpu.pipeline_mode<synchronous>, transform_indices = @transform_1, window_bounds = array<i64: 96, 128>}, {pipeline_mode = #tpu.pipeline_mode<synchronous>, transform_indices = @transform_2, window_bounds = array<i64: 1, 128>}, {transform_indices = @transform_3, window_bounds = array<i64: 16, 128>}]} {
    %c0 = arith.constant 0 : index
    %c0_0 = arith.constant 0 : index
    %0 = vector.load %arg1[%c0, %c0_0] : memref<16x96xbf16, #tpu.memory_space<vmem>>, vector<16x96xbf16>
    %c0_1 = arith.constant 0 : index
    %c0_2 = arith.constant 0 : index
    %1 = vector.load %arg2[%c0_1, %c0_2] : memref<96x128xbf16, #tpu.memory_space<vmem>>, vector<96x128xbf16>
    %cst = arith.constant dense<0.000000e+00> : vector<16x128xf32>
    %2 = tpu.matmul %0, %1, %cst {dimension_numbers = #tpu.dot_dimension_numbers<[1], [0], [0], [1], [0, 0, 1, 1], [], []>} : vector<16x96xbf16>, vector<96x128xbf16>, vector<16x128xf32> -> vector<16x128xf32>
    %c0_3 = arith.constant 0 : index
    %c0_4 = arith.constant 0 : index
    %3 = vector.load %arg3[%c0_3, %c0_4] : memref<1x128xf32, #tpu.memory_space<vmem>>, vector<1x128xf32>
    %4 = vector.broadcast %3 : vector<1x128xf32> to vector<16x128xf32>
    %5 = arith.addf %2, %4 : vector<16x128xf32>
    %c0_5 = arith.constant 0 : index
    %c0_6 = arith.constant 0 : index
    %6 = vector.load %arg4[%c0_5, %c0_6] : memref<16x128xf32, #tpu.memory_space<vmem>>, vector<16x128xf32>
    tpu.vector_store %arg4[%c0_5, %c0_6], %5 {strides = array<i32>} : memref<16x128xf32, #tpu.memory_space<vmem>>, vector<16x128xf32>,
    return
  }
  func.func @transform_0(%arg0: i32) -> (i32, i32) {
    %c0_i32 = arith.constant 0 : i32
    %c0_i32_0 = arith.constant 0 : i32
    return %arg0, %c0_i32 : i32, i32
  }
  func.func @transform_1(%arg0: i32) -> (i32, i32) {
    %c0_i32 = arith.constant 0 : i32
    %c0_i32_0 = arith.constant 0 : i32
    %c0_i32_1 = arith.constant 0 : i32
    return %c0_i32, %c0_i32_0 : i32, i32
  }
  func.func @transform_2(%arg0: i32) -> (i32, i32) {
    %c0_i32 = arith.constant 0 : i32
    %c0_i32_0 = arith.constant 0 : i32
    %c0_i32_1 = arith.constant 0 : i32
    return %c0_i32, %c0_i32_0 : i32, i32
  }
  func.func @transform_3(%arg0: i32) -> (i32, i32) {
    %c0_i32 = arith.constant 0 : i32
    %c0_i32_0 = arith.constant 0 : i32
    return %arg0, %c0_i32 : i32, i32
  }
}

module attributes {stable_mosaic.version = 11 : i64} {
  func.func @cheb_conv_kernel(%arg0: i32, %arg1: memref<16x96xbf16, #tpu.memory_space<vmem>>, %arg2: memref<96x128xbf16, #tpu.memory_space<vmem>>, %arg3: memref<1x128xf32, #tpu.memory_space<vmem>>, %arg4: memref<16x128xf32, #tpu.memory_space<vmem>>) attributes {dimension_semantics = [#tpu.dimension_semantics<parallel>], iteration_bounds = array<i64: 2>, scalar_prefetch = 0 : i64, scratch_operands = 0 : i64, tpu.core_type = #tpu.core_type<tc>, window_params = [{transform_indices = @transform_0, window_bounds = array<i64: 16, 96>}, {pipeline_mode = #tpu.pipeline_mode<synchronous>, transform_indices = @transform_1, window_bounds = array<i64: 96, 128>}, {pipeline_mode = #tpu.pipeline_mode<synchronous>, transform_indices = @transform_2, window_bounds = array<i64: 1, 128>}, {transform_indices = @transform_3, window_bounds = array<i64: 16, 128>}]} {
    %c0 = arith.constant 0 : index
    %c0_0 = arith.constant 0 : index
    %0 = vector.load %arg1[%c0, %c0_0] : memref<16x96xbf16, #tpu.memory_space<vmem>>, vector<16x96xbf16>
    %c0_1 = arith.constant 0 : index
    %c0_2 = arith.constant 0 : index
    %1 = vector.load %arg2[%c0_1, %c0_2] : memref<96x128xbf16, #tpu.memory_space<vmem>>, vector<96x128xbf16>
    %cst = arith.constant dense<0.000000e+00> : vector<16x128xf32>
    %2 = tpu.matmul %0, %1, %cst {dimension_numbers = #tpu.dot_dimension_numbers<[1], [0], [0], [1], [0, 0, 1, 1], [], []>} : vector<16x96xbf16>, vector<96x128xbf16>, vector<16x128xf32> -> vector<16x128xf32>
    %c0_3 = arith.constant 0 : index
    %c0_4 = arith.constant 0 : index
    %3 = vector.load %arg3[%c0_3, %c0_4] : memref<1x128xf32, #tpu.memory_space<vmem>>, vector<1x128xf32>
    %4 = vector.broadcast %3 : vector<1x128xf32> to vector<16x128xf32>
    %5 = arith.addf %2, %4 : vector<16x128xf32>
    %c0_5 = arith.constant 0 : index
    %c0_6 = arith.constant 0 : index
    %6 = vector.load %arg4[%c0_5, %c0_6] : memref<16x128xf32, #tpu.memory_space<vmem>>, vector<16x128xf32>
    tpu.vector_store %arg4[%c0_5, %c0_6], %5 {strides = array<i32>} : memref<16x128xf32, #tpu.memory_space<vmem>>, vector<16x128xf32>,
    return
  }
  func.func @transform_0(%arg0: i32) -> (i32, i32) {
    %c0_i32 = arith.constant 0 : i32
    %c0_i32_0 = arith.constant 0 : i32
    return %arg0, %c0_i32 : i32, i32
  }
  func.func @transform_1(%arg0: i32) -> (i32, i32) {
    %c0_i32 = arith.constant 0 : i32
    %c0_i32_0 = arith.constant 0 : i32
    %c0_i32_1 = arith.constant 0 : i32
    return %c0_i32, %c0_i32_0 : i32, i32
  }
  func.func @transform_2(%arg0: i32) -> (i32, i32) {
    %c0_i32 = arith.constant 0 : i32
    %c0_i32_0 = arith.constant 0 : i32
    %c0_i32_1 = arith.constant 0 : i32
    return %c0_i32, %c0_i32_0 : i32, i32
  }
  func.func @transform_3(%arg0: i32) -> (i32, i32) {
    %c0_i32 = arith.constant 0 : i32
    %c0_i32_0 = arith.constant 0 : i32
    return %arg0, %c0_i32 : i32, i32
  }
}

</mosaic_0001>

<llo_original>
// kernel: tpu_custom_call.1
$region0: #{tpu_custom_call.1}
  #allocation0 [shape = 'u32[]', space=smem, size = 0x4, offset = 0x4, fixed_abs, tag = 'smem constant byte address 0x4 - core index']
  #allocation1 [shape = 'u32[144,128]{1,0:T(1,128)}', space=vmem, size = 0x12000, scoped, tag = 'internal scratch']
  %s0 = inlined_call_operand.hbm [shape: bf16[32,96], index: 0, kind: input, shape index: {}]
  %s1 = inlined_call_operand.hbm [shape: bf16[96,128], index: 1, kind: input, shape index: {}]
  %s2 = inlined_call_operand.vmem [shape: f32[1,128], index: 2, kind: input, shape index: {}]
  %s3 = inlined_call_operand.hbm [shape: f32[32,128], index: 3, kind: output, shape index: {}]
  %s4 = sld [smem:[#allocation0]]
  $region53: #{tpu_custom_call.1} parent=0
    _
  %s6 = ssub.s32 1, %s4
  %s7 = scalar_select 0, %s6, %s4
  $region1: #{tpu_custom_call.1} parent=0
    #allocation2 [shape = 'u8[8192]{0}', space=vmem, size = 0x2000, scoped, tag = 'input window, operand 0']
    #allocation3 [shape = 's32[2]{0}', space=sflag, size = 0x8, scoped, tag = 'scoped memory for tpu_custom_call.1']
    #allocation4 [shape = 's32[2]{0}', space=sflag, size = 0x8, scoped, tag = 'scoped memory for tpu_custom_call.1']
    #allocation5 [shape = 'u8[24576]{0}', space=vmem, size = 0x6000, scoped, tag = 'input window, operand 1, single buffered']
    #allocation6 [shape = 's32[1]{0}', space=sflag, size = 0x4, scoped, tag = 'scoped memory for tpu_custom_call.1']
    #allocation7 [shape = 'u8[16384]{0}', space=vmem, size = 0x4000, scoped, tag = 'output window, operand 0']
    %8 = vsyncpa [#allocation3], 0
    %s9 = scalar_lea.sflag [#allocation3], 1
    %10 = vsyncpa %s9, 0
    %11 = vsyncpa [#allocation6], 0
    %12 = vsyncpa [#allocation4], 0
    %s13 = scalar_lea.sflag [#allocation4], 1
    %14 = vsyncpa %s13, 0
    loop: start=0, step=1, limit=4
    $region2: #{tpu_custom_call.1} parent=1 // loop_pre_header
      _
    $region3: #{tpu_custom_call.1} parent=1 // loop_header
      %s16 = sphi 0, %s20
      %p17 = scmp.ge.s32.totalorder %s16, 4
      %s26 = sphi 0, %s28
      %s29 = sphi 0, %s26
      %s30 = sphi 0, %s29
      %s46 = sphi 0, %s30
      %s50 = sphi 0, %s50
      %s52 = sphi 0, %s50
      %s53 = sphi 0, %s52
      %s67 = sphi 0, %s53
      %s71 = sphi 0, %s71
      %s73 = sphi 0, %s71
      %s74 = sphi 0, %s73
      %s88 = sphi 0, %s74
      %s94 = sphi 0, %s96
      %s97 = sphi 0, %s94
      %s98 = sphi 0, %s97
      %s114 = sphi 0, %s98
    $region4: #{tpu_custom_call.1} parent=1 // loop_header_branch
      %19 = sbr.rel (%p17) target = $region8
    $region5: #{tpu_custom_call.1} parent=1 // loop_body
      %s21 = ssub.s32 %s16, 1
      %s22 = ssub.s32 %s16, 2
      %s23 = sadd.s32 %s16, 1
      %s24 = ssub.s32 %s16, %s23
      %p25 = scmp.eq.s32.totalorder %s24, 0
      %s27 = sadd.s32 %s26, 1
      %s28 = scalar_select %p25, %s26, %s27
      %p31 = pneg %p25
      %p32 = scmp.eq.s32.totalorder %s16, 1
      %p33 = por %p31, %p32
      %p34 = scmp.ne.s32.totalorder %s26, %s29
      %p35 = scmp.eq.s32.totalorder %s16, 0
      %p36 = por %p34, %p35
      %p37 = scmp.ne.s32.totalorder %s26, %s29
      %p38 = scmp.eq.s32.totalorder %s21, 1
      %p39 = por %p37, %p38
      %p40 = scmp.ne.s32.totalorder %s29, %s30
      %p41 = scmp.eq.s32.totalorder %s21, 0
      %p42 = por %p40, %p41
      %p43 = scmp.ne.s32.totalorder %s29, %s30
      %p44 = scmp.eq.s32.totalorder %s22, 1
      %p45 = por %p43, %p44
      %p47 = scmp.ne.s32.totalorder %s30, %s46
      %p48 = scmp.eq.s32.totalorder %s22, 0
      %p49 = por %p47, %p48
      %s51 = sadd.s32 %s50, 1
      %p54 = scmp.eq.s32.totalorder %s16, 1
      %p55 = scmp.ne.s32.totalorder %s50, %s52
      %p56 = scmp.eq.s32.totalorder %s16, 0
      %p57 = por %p55, %p56
      %p58 = scmp.ne.s32.totalorder %s50, %s52
      %p59 = scmp.eq.s32.totalorder %s21, 1
      %p60 = por %p58, %p59
      %p61 = scmp.ne.s32.totalorder %s52, %s53
      %p62 = scmp.eq.s32.totalorder %s21, 0
      %p63 = por %p61, %p62
      %p64 = scmp.ne.s32.totalorder %s52, %s53
      %p65 = scmp.eq.s32.totalorder %s22, 1
      %p66 = por %p64, %p65
      %p68 = scmp.ne.s32.totalorder %s53, %s67
      %p69 = scmp.eq.s32.totalorder %s22, 0
      %p70 = por %p68, %p69
      %s72 = sadd.s32 %s71, 1
      %p75 = scmp.eq.s32.totalorder %s16, 1
      %p76 = scmp.ne.s32.totalorder %s71, %s73
      %p77 = scmp.eq.s32.totalorder %s16, 0
      %p78 = por %p76, %p77
      %p79 = scmp.ne.s32.totalorder %s71, %s73
      %p80 = scmp.eq.s32.totalorder %s21, 1
      %p81 = por %p79, %p80
      %p82 = scmp.ne.s32.totalorder %s73, %s74
      %p83 = scmp.eq.s32.totalorder %s21, 0
      %p84 = por %p82, %p83
      %p85 = scmp.ne.s32.totalorder %s73, %s74
      %p86 = scmp.eq.s32.totalorder %s22, 1
      %p87 = por %p85, %p86
      %p89 = scmp.ne.s32.totalorder %s74, %s88
      %p90 = scmp.eq.s32.totalorder %s22, 0
      %p91 = por %p89, %p90
      %s92 = ssub.s32 %s16, %s23
      %p93 = scmp.eq.s32.totalorder %s92, 0
      %s95 = sadd.s32 %s94, 1
      %s96 = scalar_select %p93, %s94, %s95
      %p99 = pneg %p93
      %p100 = scmp.eq.s32.totalorder %s16, 1
      %p101 = por %p99, %p100
      %p102 = scmp.ne.s32.totalorder %s94, %s97
      %p103 = scmp.eq.s32.totalorder %s16, 0
      %p104 = por %p102, %p103
      %p105 = scmp.ne.s32.totalorder %s94, %s97
      %p106 = scmp.eq.s32.totalorder %s21, 1
      %p107 = por %p105, %p106
      %p108 = scmp.ne.s32.totalorder %s97, %s98
      %p109 = scmp.eq.s32.totalorder %s21, 0
      %p110 = por %p108, %p109
      %p111 = scmp.ne.s32.totalorder %s97, %s98
      %p112 = scmp.eq.s32.totalorder %s22, 1
      %p113 = por %p111, %p112
      %p115 = scmp.ne.s32.totalorder %s98, %s114
      %p116 = scmp.eq.s32.totalorder %s22, 0
      %p117 = por %p115, %p116
      %p118 = scmp.le.s32.totalorder 1, %s16
      %p119 = scmp.lt.s32.totalorder %s16, 3
      %p120 = pnand %p118, %p119
      %p121 = pneg %p120
      // Predicated region
      $region9: #{tpu_custom_call.1} parent=5 // pred_check
        _
      $region10: #{tpu_custom_call.1} parent=5 // pred_check_branch
        %123 = sbr.rel (%p120) target = $region12
      $region11: #{tpu_custom_call.1} parent=5 // pred_region
        %s124 = ssub.s32 %s16, 1
        // Predicated region
        $region13: #{tpu_custom_call.1} parent=11 // pred_check
          %p125 = pneg %p63
        $region14: #{tpu_custom_call.1} parent=11 // pred_check_branch
          %127 = sbr.rel (%p125) target = $region16
        $region15: #{tpu_custom_call.1} parent=11 // pred_region
          %s129 = ssub.s32 768, 768
          %130 = vsyncadd [#allocation6], %s129
          %s131 = sshll.u32 [#allocation5], 4
          %s132 = int_to_ptr.vmem [resolvable:$true] %s131
          %137 = dma.hbm_to_vmem [thread:$0]  %s1, 768, %s132, [#allocation6], 64, 64, 4
        $region16: #{tpu_custom_call.1} parent=11 // pred_fallthru
          _
        // Predicated region
        $region17: #{tpu_custom_call.1} parent=11 // pred_check
          %p138 = pneg %p84
        $region18: #{tpu_custom_call.1} parent=11 // pred_check_branch
          %140 = sbr.rel (%p138) target = $region20
        $region19: #{tpu_custom_call.1} parent=11 // pred_region
          _
        $region20: #{tpu_custom_call.1} parent=11 // pred_fallthru
          _
      $region12: #{tpu_custom_call.1} parent=5 // pred_fallthru
        _
      %p141 = scmp.lt.s32.totalorder %s16, 2
      // Predicated region
      $region21: #{tpu_custom_call.1} parent=5 // pred_check
        %p142 = pneg %p141
      $region22: #{tpu_custom_call.1} parent=5 // pred_check_branch
        %144 = sbr.rel (%p142) target = $region24
      $region23: #{tpu_custom_call.1} parent=5 // pred_region
        // Predicated region
        $region25: #{tpu_custom_call.1} parent=23 // pred_check
          %p145 = pneg %p36
        $region26: #{tpu_custom_call.1} parent=23 // pred_check_branch
          %147 = sbr.rel (%p145) target = $region28
        $region27: #{tpu_custom_call.1} parent=23 // pred_region
          %s148 = sand.u32 %s26, 1
          %s149 = scalar_lea.sflag [#allocation3], %s148
          %s150 = sand.u32 %s26, 1
          %s151 = smul.addr %s150, 8
          %s152 = scalar_lea.vmem [#allocation2], %s151
          %s153 = smul.u32 2, %s16
          %s155 = ssub.s32 128, 128
          %156 = vsyncadd %s149, %s155
          %s157 = smul.addr %s153, 64
          %s158 = scalar_lea.hbm %s0, %s157
          %s159 = sshll.u32 %s152, 4
          %s160 = int_to_ptr.vmem [resolvable:$true] %s159
          %165 = dma.hbm_to_vmem [thread:$0]  %s158, 128, %s160, %s149, 64, 64, 4
        $region28: #{tpu_custom_call.1} parent=23 // pred_fallthru
          _
      $region24: #{tpu_custom_call.1} parent=5 // pred_fallthru
        _
      %p166 = scmp.le.s32.totalorder 1, %s16
      %p167 = scmp.lt.s32.totalorder %s16, 3
      %p168 = pnand %p166, %p167
      %p169 = pneg %p168
      // Predicated region
      $region29: #{tpu_custom_call.1} parent=5 // pred_check
        _
      $region30: #{tpu_custom_call.1} parent=5 // pred_check_branch
        %171 = sbr.rel (%p168) target = $region32
      $region31: #{tpu_custom_call.1} parent=5 // pred_region
        %s172 = ssub.s32 %s16, 1
        %s173 = sand.u32 %s29, 1
        %s174 = scalar_lea.sflag [#allocation3], %s173
        %s175 = sand.u32 %s29, 1
        %s176 = smul.addr %s175, 8
        %s177 = scalar_lea.vmem [#allocation2], %s176
        // Predicated region
        $region33: #{tpu_custom_call.1} parent=31 // pred_check
          %p178 = pneg %p42
        $region34: #{tpu_custom_call.1} parent=31 // pred_check_branch
          %180 = sbr.rel (%p178) target = $region36
        $region35: #{tpu_custom_call.1} parent=31 // pred_region
          %181 = dma.done %s174, 128
        $region36: #{tpu_custom_call.1} parent=31 // pred_fallthru
          _
        // Predicated region
        $region37: #{tpu_custom_call.1} parent=31 // pred_check
          %p182 = pneg %p63
        $region38: #{tpu_custom_call.1} parent=31 // pred_check_branch
          %184 = sbr.rel (%p182) target = $region40
        $region39: #{tpu_custom_call.1} parent=31 // pred_region
          %185 = dma.done [#allocation6], 768
        $region40: #{tpu_custom_call.1} parent=31 // pred_fallthru
          _
        %s186 = sand.u32 %s29, 1
        %s187 = scalar_lea.sflag [#allocation3], %s186
        %s188 = sand.u32 %s29, 1
        %s189 = smul.addr %s188, 8
        %s190 = scalar_lea.vmem [#allocation2], %s189
        %p191 = pneg %p42
        %p192 = pneg %p39
        %p193 = pneg %p63
        %p194 = pneg %p60
        %p195 = pneg %p84
        %p196 = pneg %p81
        %p197 = pneg %p110
        %p198 = pneg %p107
        %s199 = sand.u32 %s97, 1
        %s200 = scalar_lea.sflag [#allocation4], %s199
        %s201 = sand.u32 %s97, 1
        %s202 = smul.addr %s201, 16
        %s203 = scalar_lea.vmem [#allocation7], %s202
        %s204 = smul.u32 2, %s21
        %s205 = smul.u32 2, %s21
        %v207 = vld [vmem:[%s177] sm:$0xf]
        %v208 = vld [vmem:[%s177 + $0x4] sm:$0xf]
        %v209 = vld [vmem:[#allocation5] sm:$0xf]
        %v210 = vld [vmem:[#allocation5 + $0x4] sm:$0xf]
        %v211 = vld [vmem:[#allocation5 + $0x8] sm:$0xf]
        %v212 = vld [vmem:[#allocation5 + $0xc] sm:$0xf]
        %v213 = vld [vmem:[#allocation5 + $0x10] sm:$0xf]
        %v214 = vld [vmem:[#allocation5 + $0x14] sm:$0xf]
        %v215 = vld [vmem:[#allocation5 + $0x18] sm:$0xf]
        %v216 = vld [vmem:[#allocation5 + $0x1c] sm:$0xf]
        %v217 = vld [vmem:[#allocation5 + $0x20] sm:$0xf]
        %v218 = vld [vmem:[#allocation5 + $0x24] sm:$0xf]
        %v219 = vld [vmem:[#allocation5 + $0x28] sm:$0xf]
        %v220 = vld [vmem:[#allocation5 + $0x2c] sm:$0xf]
        %v221 = vld [vmem:[%s2] sm:$0x1]
        %v223 = vlaneseq
        %v224 = vshrl.u32 %v223, 7
        %v225 = vsub.s32 0, %v224
        %v226 = vrot.slane %v221, %v225
        %v230 = vunpack.c.l.b16 %v207
        %v231 = vunpack.c.l.b16 %v208
        %v232 = vpack.c.b16 %v231, %v230
        %v245 = vunpack.c.l.b16 %v209
        %v246 = vunpack.c.l.b16 %v210
        %v247 = vunpack.c.l.b16 %v211
        %v248 = vunpack.c.l.b16 %v212
        %v249 = vunpack.c.l.b16 %v213
        %v250 = vunpack.c.l.b16 %v214
        %v251 = vunpack.c.l.b16 %v215
        %v252 = vunpack.c.l.b16 %v216
        %v253 = vunpack.c.l.b16 %v217
        %v254 = vunpack.c.l.b16 %v218
        %v255 = vunpack.c.l.b16 %v219
        %v256 = vunpack.c.l.b16 %v220
        %v257 = vpack.c.b16 %v246, %v245
        %v258 = vpack.c.b16 %v248, %v247
        %v259 = vpack.c.b16 %v250, %v249
        %v260 = vpack.c.b16 %v252, %v251
        %v261 = vpack.c.b16 %v254, %v253
        %v262 = vpack.c.b16 %v256, %v255
        %vm269 = vcmask 785408
        %v271 = vsel %vm269, %v232, 0
        %273 = vmatprep.subr.bf16.mxu0 0
        %274 = vmatpush1.bf16.msra.mxu0 0
        %275 = vmatprep.subr.bf16.mxu0 0
        %276 = vmatpush1.bf16.msra.mxu0 0
        %277 = vmatprep.subr.bf16.mxu0 0
        %278 = vmatpush1.bf16.msra.mxu0 %v262
        %279 = vmatprep.subr.bf16.mxu0 0
        %280 = vmatpush1.bf16.msra.mxu0 %v261
        %281 = vmatprep.subr.bf16.mxu0 0
        %282 = vmatpush1.bf16.msra.mxu0 %v260
        %283 = vmatprep.subr.bf16.mxu0 0
        %284 = vmatpush1.bf16.msra.mxu0 %v259
        %285 = vmatprep.subr.bf16.mxu0 0
        %286 = vmatpush1.bf16.msra.mxu0 %v258
        %287 = vmatprep.subr.bf16.mxu0 0
        %288 = vmatpush1.bf16.msra.mxu0 %v257
        %289 = vmatprep.subr.bf16.mxu0 0
        %290 = vmatpush2.bf16.msra.mxu0 0
        %291 = vmatprep.subr.bf16.mxu0 0
        %292 = vmatpush2.bf16.msra.mxu0 0
        %293 = vmatprep.subr.bf16.mxu0 0
        %294 = vmatpush2.bf16.msra.mxu0 0
        %295 = vmatprep.subr.bf16.mxu0 0
        %296 = vmatpush2.bf16.msra.mxu0 0
        %297 = vmatprep.subr.bf16.mxu0 0
        %298 = vmatpush2.bf16.msra.mxu0 0
        %299 = vmatprep.subr.bf16.mxu0 0
        %300 = vmatpush2.bf16.msra.mxu0 0
        %301 = vmatprep.subr.bf16.mxu0 0
        %302 = vmatpush2.bf16.msra.mxu0 0
        %303 = vmatprep.subr.bf16.mxu0 0
        %304 = vmatpush2.bf16.msra.mxu0 0
        %305 = vmatprep.mubr.bf16.mxu0 0
        %306 = vmatmul.mubr.bf16.gmra.mxu0 %v271
        %v307 = vpop.f32.mrf.mxu0
        %v308 = vadd.f32 %v226, %v307
        %v309 = vpop.f32.mrf.mxu0
        %v310 = vpop.f32.mrf.mxu0
        %v311 = vadd.f32 %v226, %v310
        %v312 = vpop.f32.mrf.mxu0
        %313 = vdwg.mxu0
        %314 = vst [vmem:[%s203] sm:$0xff] %v308
        %315 = vst [vmem:[%s203 + $0x8] sm:$0xff] %v311
        %s316 = sand.u32 %s97, 1
        %s317 = scalar_lea.sflag [#allocation4], %s316
        %s318 = sand.u32 %s97, 1
        %s319 = smul.addr %s318, 16
        %s320 = scalar_lea.vmem [#allocation7], %s319
        // Predicated region
        $region41: #{tpu_custom_call.1} parent=31 // pred_check
          %p321 = pneg %p107
        $region42: #{tpu_custom_call.1} parent=31 // pred_check_branch
          %323 = sbr.rel (%p321) target = $region44
        $region43: #{tpu_custom_call.1} parent=31 // pred_region
          %s324 = smul.u32 2, %s21
          %s326 = ssub.s32 256, 256
          %327 = vsyncadd %s317, %s326
          %s328 = smul.addr %s324, 128
          %s329 = scalar_lea.hbm %s3, %s328
          %s330 = sshll.u32 %s320, 4
          %s331 = int_to_ptr.vmem [resolvable:$true] %s330
          %336 = dma.vmem_to_hbm [thread:$0]  %s331, 256, %s329, %s317, 128, 128, 8
        $region44: #{tpu_custom_call.1} parent=31 // pred_fallthru
          _
      $region32: #{tpu_custom_call.1} parent=5 // pred_fallthru
        _
      %p337 = scmp.le.s32.totalorder 2, %s16
      // Predicated region
      $region45: #{tpu_custom_call.1} parent=5 // pred_check
        %p338 = pneg %p337
      $region46: #{tpu_custom_call.1} parent=5 // pred_check_branch
        %340 = sbr.rel (%p338) target = $region48
      $region47: #{tpu_custom_call.1} parent=5 // pred_region
        %s341 = ssub.s32 %s16, 2
        // Predicated region
        $region49: #{tpu_custom_call.1} parent=47 // pred_check
          %p342 = pneg %p113
        $region50: #{tpu_custom_call.1} parent=47 // pred_check_branch
          %344 = sbr.rel (%p342) target = $region52
        $region51: #{tpu_custom_call.1} parent=47 // pred_region
          %s345 = sand.u32 %s98, 1
          %s346 = scalar_lea.sflag [#allocation4], %s345
          %s347 = sand.u32 %s98, 1
          %s348 = smul.addr %s347, 16
          %s349 = scalar_lea.vmem [#allocation7], %s348
          %350 = dma.done %s346, 256
        $region52: #{tpu_custom_call.1} parent=47 // pred_fallthru
          _
      $region48: #{tpu_custom_call.1} parent=5 // pred_fallthru
        _
    $region6: #{tpu_custom_call.1} parent=1 // loop_footer
      %s20 = sadd.s32 1, %s16
    $region7: #{tpu_custom_call.1} parent=1 // loop_footer_branch
      %15 = sbr.rel target = $region3
    $region8: #{tpu_custom_call.1} parent=1 // loop_exit
      _
    %351 = vsyncpa [#allocation3], 1
    %s352 = scalar_lea.sflag [#allocation3], 1
    %353 = vsyncpa %s352, 1
    %354 = vsyncpa [#allocation6], 1
    %355 = vsyncpa [#allocation4], 1
    %s356 = scalar_lea.sflag [#allocation4], 1
    %357 = vsyncpa %s356, 1

// kernel: tpu_custom_call.1
$region0: #{tpu_custom_call.1}
  #allocation0 [shape = 'u32[]', space=smem, size = 0x4, offset = 0x4, fixed_abs, tag = 'smem constant byte address 0x4 - core index']
  #allocation1 [shape = 'u32[144,128]{1,0:T(1,128)}', space=vmem, size = 0x12000, scoped, tag = 'internal scratch']
  %s0 = inlined_call_operand.hbm [shape: bf16[32,96], index: 0, kind: input, shape index: {}]
  %s1 = inlined_call_operand.hbm [shape: bf16[96,128], index: 1, kind: input, shape index: {}]
  %s2 = inlined_call_operand.vmem [shape: f32[1,128], index: 2, kind: input, shape index: {}]
  %s3 = inlined_call_operand.hbm [shape: f32[32,128], index: 3, kind: output, shape index: {}]
  %s4 = sld [smem:[#allocation0]]
  $region53: #{tpu_custom_call.1} parent=0
    _
  %s6 = ssub.s32 1, %s4
  %s7 = scalar_select 0, %s6, %s4
  $region1: #{tpu_custom_call.1} parent=0
    #allocation2 [shape = 'u8[8192]{0}', space=vmem, size = 0x2000, scoped, tag = 'input window, operand 0']
    #allocation3 [shape = 's32[2]{0}', space=sflag, size = 0x8, scoped, tag = 'scoped memory for tpu_custom_call.1']
    #allocation4 [shape = 's32[2]{0}', space=sflag, size = 0x8, scoped, tag = 'scoped memory for tpu_custom_call.1']
    #allocation5 [shape = 'u8[24576]{0}', space=vmem, size = 0x6000, scoped, tag = 'input window, operand 1, single buffered']
    #allocation6 [shape = 's32[1]{0}', space=sflag, size = 0x4, scoped, tag = 'scoped memory for tpu_custom_call.1']
    #allocation7 [shape = 'u8[16384]{0}', space=vmem, size = 0x4000, scoped, tag = 'output window, operand 0']
    %8 = vsyncpa [#allocation3], 0
    %s9 = scalar_lea.sflag [#allocation3], 1
    %10 = vsyncpa %s9, 0
    %11 = vsyncpa [#allocation6], 0
    %12 = vsyncpa [#allocation4], 0
    %s13 = scalar_lea.sflag [#allocation4], 1
    %14 = vsyncpa %s13, 0
    loop: start=0, step=1, limit=4
    $region2: #{tpu_custom_call.1} parent=1 // loop_pre_header
      _
    $region3: #{tpu_custom_call.1} parent=1 // loop_header
      %s16 = sphi 0, %s20
      %p17 = scmp.ge.s32.totalorder %s16, 4
      %s26 = sphi 0, %s28
      %s29 = sphi 0, %s26
      %s30 = sphi 0, %s29
      %s46 = sphi 0, %s30
      %s50 = sphi 0, %s50
      %s52 = sphi 0, %s50
      %s53 = sphi 0, %s52
      %s67 = sphi 0, %s53
      %s71 = sphi 0, %s71
      %s73 = sphi 0, %s71
      %s74 = sphi 0, %s73
      %s88 = sphi 0, %s74
      %s94 = sphi 0, %s96
      %s97 = sphi 0, %s94
      %s98 = sphi 0, %s97
      %s114 = sphi 0, %s98
    $region4: #{tpu_custom_call.1} parent=1 // loop_header_branch
      %19 = sbr.rel (%p17) target = $region8
    $region5: #{tpu_custom_call.1} parent=1 // loop_body
      %s21 = ssub.s32 %s16, 1
      %s22 = ssub.s32 %s16, 2
      %s23 = sadd.s32 %s16, 1
      %s24 = ssub.s32 %s16, %s23
      %p25 = scmp.eq.s32.totalorder %s24, 0
      %s27 = sadd.s32 %s26, 1
      %s28 = scalar_select %p25, %s26, %s27
      %p31 = pneg %p25
      %p32 = scmp.eq.s32.totalorder %s16, 1
      %p33 = por %p31, %p32
      %p34 = scmp.ne.s32.totalorder %s26, %s29
      %p35 = scmp.eq.s32.totalorder %s16, 0
      %p36 = por %p34, %p35
      %p37 = scmp.ne.s32.totalorder %s26, %s29
      %p38 = scmp.eq.s32.totalorder %s21, 1
      %p39 = por %p37, %p38
      %p40 = scmp.ne.s32.totalorder %s29, %s30
      %p41 = scmp.eq.s32.totalorder %s21, 0
      %p42 = por %p40, %p41
      %p43 = scmp.ne.s32.totalorder %s29, %s30
      %p44 = scmp.eq.s32.totalorder %s22, 1
      %p45 = por %p43, %p44
      %p47 = scmp.ne.s32.totalorder %s30, %s46
      %p48 = scmp.eq.s32.totalorder %s22, 0
      %p49 = por %p47, %p48
      %s51 = sadd.s32 %s50, 1
      %p54 = scmp.eq.s32.totalorder %s16, 1
      %p55 = scmp.ne.s32.totalorder %s50, %s52
      %p56 = scmp.eq.s32.totalorder %s16, 0
      %p57 = por %p55, %p56
      %p58 = scmp.ne.s32.totalorder %s50, %s52
      %p59 = scmp.eq.s32.totalorder %s21, 1
      %p60 = por %p58, %p59
      %p61 = scmp.ne.s32.totalorder %s52, %s53
      %p62 = scmp.eq.s32.totalorder %s21, 0
      %p63 = por %p61, %p62
      %p64 = scmp.ne.s32.totalorder %s52, %s53
      %p65 = scmp.eq.s32.totalorder %s22, 1
      %p66 = por %p64, %p65
      %p68 = scmp.ne.s32.totalorder %s53, %s67
      %p69 = scmp.eq.s32.totalorder %s22, 0
      %p70 = por %p68, %p69
      %s72 = sadd.s32 %s71, 1
      %p75 = scmp.eq.s32.totalorder %s16, 1
      %p76 = scmp.ne.s32.totalorder %s71, %s73
      %p77 = scmp.eq.s32.totalorder %s16, 0
      %p78 = por %p76, %p77
      %p79 = scmp.ne.s32.totalorder %s71, %s73
      %p80 = scmp.eq.s32.totalorder %s21, 1
      %p81 = por %p79, %p80
      %p82 = scmp.ne.s32.totalorder %s73, %s74
      %p83 = scmp.eq.s32.totalorder %s21, 0
      %p84 = por %p82, %p83
      %p85 = scmp.ne.s32.totalorder %s73, %s74
      %p86 = scmp.eq.s32.totalorder %s22, 1
      %p87 = por %p85, %p86
      %p89 = scmp.ne.s32.totalorder %s74, %s88
      %p90 = scmp.eq.s32.totalorder %s22, 0
      %p91 = por %p89, %p90
      %s92 = ssub.s32 %s16, %s23
      %p93 = scmp.eq.s32.totalorder %s92, 0
      %s95 = sadd.s32 %s94, 1
      %s96 = scalar_select %p93, %s94, %s95
      %p99 = pneg %p93
      %p100 = scmp.eq.s32.totalorder %s16, 1
      %p101 = por %p99, %p100
      %p102 = scmp.ne.s32.totalorder %s94, %s97
      %p103 = scmp.eq.s32.totalorder %s16, 0
      %p104 = por %p102, %p103
      %p105 = scmp.ne.s32.totalorder %s94, %s97
      %p106 = scmp.eq.s32.totalorder %s21, 1
      %p107 = por %p105, %p106
      %p108 = scmp.ne.s32.totalorder %s97, %s98
      %p109 = scmp.eq.s32.totalorder %s21, 0
      %p110 = por %p108, %p109
      %p111 = scmp.ne.s32.totalorder %s97, %s98
      %p112 = scmp.eq.s32.totalorder %s22, 1
      %p113 = por %p111, %p112
      %p115 = scmp.ne.s32.totalorder %s98, %s114
      %p116 = scmp.eq.s32.totalorder %s22, 0
      %p117 = por %p115, %p116
      %p118 = scmp.le.s32.totalorder 1, %s16
      %p119 = scmp.lt.s32.totalorder %s16, 3
      %p120 = pnand %p118, %p119
      %p121 = pneg %p120
      // Predicated region
      $region9: #{tpu_custom_call.1} parent=5 // pred_check
        _
      $region10: #{tpu_custom_call.1} parent=5 // pred_check_branch
        %123 = sbr.rel (%p120) target = $region12
      $region11: #{tpu_custom_call.1} parent=5 // pred_region
        %s124 = ssub.s32 %s16, 1
        // Predicated region
        $region13: #{tpu_custom_call.1} parent=11 // pred_check
          %p125 = pneg %p63
        $region14: #{tpu_custom_call.1} parent=11 // pred_check_branch
          %127 = sbr.rel (%p125) target = $region16
        $region15: #{tpu_custom_call.1} parent=11 // pred_region
          %s129 = ssub.s32 768, 768
          %130 = vsyncadd [#allocation6], %s129
          %s131 = sshll.u32 [#allocation5], 4
          %s132 = int_to_ptr.vmem [resolvable:$true] %s131
          %137 = dma.hbm_to_vmem [thread:$0]  %s1, 768, %s132, [#allocation6], 64, 64, 4
        $region16: #{tpu_custom_call.1} parent=11 // pred_fallthru
          _
        // Predicated region
        $region17: #{tpu_custom_call.1} parent=11 // pred_check
          %p138 = pneg %p84
        $region18: #{tpu_custom_call.1} parent=11 // pred_check_branch
          %140 = sbr.rel (%p138) target = $region20
        $region19: #{tpu_custom_call.1} parent=11 // pred_region
          _
        $region20: #{tpu_custom_call.1} parent=11 // pred_fallthru
          _
      $region12: #{tpu_custom_call.1} parent=5 // pred_fallthru
        _
      %p141 = scmp.lt.s32.totalorder %s16, 2
      // Predicated region
      $region21: #{tpu_custom_call.1} parent=5 // pred_check
        %p142 = pneg %p141
      $region22: #{tpu_custom_call.1} parent=5 // pred_check_branch
        %144 = sbr.rel (%p142) target = $region24
      $region23: #{tpu_custom_call.1} parent=5 // pred_region
        // Predicated region
        $region25: #{tpu_custom_call.1} parent=23 // pred_check
          %p145 = pneg %p36
        $region26: #{tpu_custom_call.1} parent=23 // pred_check_branch
          %147 = sbr.rel (%p145) target = $region28
        $region27: #{tpu_custom_call.1} parent=23 // pred_region
          %s148 = sand.u32 %s26, 1
          %s149 = scalar_lea.sflag [#allocation3], %s148
          %s150 = sand.u32 %s26, 1
          %s151 = smul.addr %s150, 8
          %s152 = scalar_lea.vmem [#allocation2], %s151
          %s153 = smul.u32 2, %s16
          %s155 = ssub.s32 128, 128
          %156 = vsyncadd %s149, %s155
          %s157 = smul.addr %s153, 64
          %s158 = scalar_lea.hbm %s0, %s157
          %s159 = sshll.u32 %s152, 4
          %s160 = int_to_ptr.vmem [resolvable:$true] %s159
          %165 = dma.hbm_to_vmem [thread:$0]  %s158, 128, %s160, %s149, 64, 64, 4
        $region28: #{tpu_custom_call.1} parent=23 // pred_fallthru
          _
      $region24: #{tpu_custom_call.1} parent=5 // pred_fallthru
        _
      %p166 = scmp.le.s32.totalorder 1, %s16
      %p167 = scmp.lt.s32.totalorder %s16, 3
      %p168 = pnand %p166, %p167
      %p169 = pneg %p168
      // Predicated region
      $region29: #{tpu_custom_call.1} parent=5 // pred_check
        _
      $region30: #{tpu_custom_call.1} parent=5 // pred_check_branch
        %171 = sbr.rel (%p168) target = $region32
      $region31: #{tpu_custom_call.1} parent=5 // pred_region
        %s172 = ssub.s32 %s16, 1
        %s173 = sand.u32 %s29, 1
        %s174 = scalar_lea.sflag [#allocation3], %s173
        %s175 = sand.u32 %s29, 1
        %s176 = smul.addr %s175, 8
        %s177 = scalar_lea.vmem [#allocation2], %s176
        // Predicated region
        $region33: #{tpu_custom_call.1} parent=31 // pred_check
          %p178 = pneg %p42
        $region34: #{tpu_custom_call.1} parent=31 // pred_check_branch
          %180 = sbr.rel (%p178) target = $region36
        $region35: #{tpu_custom_call.1} parent=31 // pred_region
          %181 = dma.done %s174, 128
        $region36: #{tpu_custom_call.1} parent=31 // pred_fallthru
          _
        // Predicated region
        $region37: #{tpu_custom_call.1} parent=31 // pred_check
          %p182 = pneg %p63
        $region38: #{tpu_custom_call.1} parent=31 // pred_check_branch
          %184 = sbr.rel (%p182) target = $region40
        $region39: #{tpu_custom_call.1} parent=31 // pred_region
          %185 = dma.done [#allocation6], 768
        $region40: #{tpu_custom_call.1} parent=31 // pred_fallthru
          _
        %s186 = sand.u32 %s29, 1
        %s187 = scalar_lea.sflag [#allocation3], %s186
        %s188 = sand.u32 %s29, 1
        %s189 = smul.addr %s188, 8
        %s190 = scalar_lea.vmem [#allocation2], %s189
        %p191 = pneg %p42
        %p192 = pneg %p39
        %p193 = pneg %p63
        %p194 = pneg %p60
        %p195 = pneg %p84
        %p196 = pneg %p81
        %p197 = pneg %p110
        %p198 = pneg %p107
        %s199 = sand.u32 %s97, 1
        %s200 = scalar_lea.sflag [#allocation4], %s199
        %s201 = sand.u32 %s97, 1
        %s202 = smul.addr %s201, 16
        %s203 = scalar_lea.vmem [#allocation7], %s202
        %s204 = smul.u32 2, %s21
        %s205 = smul.u32 2, %s21
        %v207 = vld [vmem:[%s177] sm:$0xf]
        %v208 = vld [vmem:[%s177 + $0x4] sm:$0xf]
        %v209 = vld [vmem:[#allocation5] sm:$0xf]
        %v210 = vld [vmem:[#allocation5 + $0x4] sm:$0xf]
        %v211 = vld [vmem:[#allocation5 + $0x8] sm:$0xf]
        %v212 = vld [vmem:[#allocation5 + $0xc] sm:$0xf]
        %v213 = vld [vmem:[#allocation5 + $0x10] sm:$0xf]
        %v214 = vld [vmem:[#allocation5 + $0x14] sm:$0xf]
        %v215 = vld [vmem:[#allocation5 + $0x18] sm:$0xf]
        %v216 = vld [vmem:[#allocation5 + $0x1c] sm:$0xf]
        %v217 = vld [vmem:[#allocation5 + $0x20] sm:$0xf]
        %v218 = vld [vmem:[#allocation5 + $0x24] sm:$0xf]
        %v219 = vld [vmem:[#allocation5 + $0x28] sm:$0xf]
        %v220 = vld [vmem:[#allocation5 + $0x2c] sm:$0xf]
        %v221 = vld [vmem:[%s2] sm:$0x1]
        %v223 = vlaneseq
        %v224 = vshrl.u32 %v223, 7
        %v225 = vsub.s32 0, %v224
        %v226 = vrot.slane %v221, %v225
        %v230 = vunpack.c.l.b16 %v207
        %v231 = vunpack.c.l.b16 %v208
        %v232 = vpack.c.b16 %v231, %v230
        %v245 = vunpack.c.l.b16 %v209
        %v246 = vunpack.c.l.b16 %v210
        %v247 = vunpack.c.l.b16 %v211
        %v248 = vunpack.c.l.b16 %v212
        %v249 = vunpack.c.l.b16 %v213
        %v250 = vunpack.c.l.b16 %v214
        %v251 = vunpack.c.l.b16 %v215
        %v252 = vunpack.c.l.b16 %v216
        %v253 = vunpack.c.l.b16 %v217
        %v254 = vunpack.c.l.b16 %v218
        %v255 = vunpack.c.l.b16 %v219
        %v256 = vunpack.c.l.b16 %v220
        %v257 = vpack.c.b16 %v246, %v245
        %v258 = vpack.c.b16 %v248, %v247
        %v259 = vpack.c.b16 %v250, %v249
        %v260 = vpack.c.b16 %v252, %v251
        %v261 = vpack.c.b16 %v254, %v253
        %v262 = vpack.c.b16 %v256, %v255
        %vm269 = vcmask 785408
        %v271 = vsel %vm269, %v232, 0
        %273 = vmatprep.subr.bf16.mxu0 0
        %274 = vmatpush1.bf16.msra.mxu0 0
        %275 = vmatprep.subr.bf16.mxu0 0
        %276 = vmatpush1.bf16.msra.mxu0 0
        %277 = vmatprep.subr.bf16.mxu0 0
        %278 = vmatpush1.bf16.msra.mxu0 %v262
        %279 = vmatprep.subr.bf16.mxu0 0
        %280 = vmatpush1.bf16.msra.mxu0 %v261
        %281 = vmatprep.subr.bf16.mxu0 0
        %282 = vmatpush1.bf16.msra.mxu0 %v260
        %283 = vmatprep.subr.bf16.mxu0 0
        %284 = vmatpush1.bf16.msra.mxu0 %v259
        %285 = vmatprep.subr.bf16.mxu0 0
        %286 = vmatpush1.bf16.msra.mxu0 %v258
        %287 = vmatprep.subr.bf16.mxu0 0
        %288 = vmatpush1.bf16.msra.mxu0 %v257
        %289 = vmatprep.subr.bf16.mxu0 0
        %290 = vmatpush2.bf16.msra.mxu0 0
        %291 = vmatprep.subr.bf16.mxu0 0
        %292 = vmatpush2.bf16.msra.mxu0 0
        %293 = vmatprep.subr.bf16.mxu0 0
        %294 = vmatpush2.bf16.msra.mxu0 0
        %295 = vmatprep.subr.bf16.mxu0 0
        %296 = vmatpush2.bf16.msra.mxu0 0
        %297 = vmatprep.subr.bf16.mxu0 0
        %298 = vmatpush2.bf16.msra.mxu0 0
        %299 = vmatprep.subr.bf16.mxu0 0
        %300 = vmatpush2.bf16.msra.mxu0 0
        %301 = vmatprep.subr.bf16.mxu0 0
        %302 = vmatpush2.bf16.msra.mxu0 0
        %303 = vmatprep.subr.bf16.mxu0 0
        %304 = vmatpush2.bf16.msra.mxu0 0
        %305 = vmatprep.mubr.bf16.mxu0 0
        %306 = vmatmul.mubr.bf16.gmra.mxu0 %v271
        %v307 = vpop.f32.mrf.mxu0
        %v308 = vadd.f32 %v226, %v307
        %v309 = vpop.f32.mrf.mxu0
        %v310 = vpop.f32.mrf.mxu0
        %v311 = vadd.f32 %v226, %v310
        %v312 = vpop.f32.mrf.mxu0
        %313 = vdwg.mxu0
        %314 = vst [vmem:[%s203] sm:$0xff] %v308
        %315 = vst [vmem:[%s203 + $0x8] sm:$0xff] %v311
        %s316 = sand.u32 %s97, 1
        %s317 = scalar_lea.sflag [#allocation4], %s316
        %s318 = sand.u32 %s97, 1
        %s319 = smul.addr %s318, 16
        %s320 = scalar_lea.vmem [#allocation7], %s319
        // Predicated region
        $region41: #{tpu_custom_call.1} parent=31 // pred_check
          %p321 = pneg %p107
        $region42: #{tpu_custom_call.1} parent=31 // pred_check_branch
          %323 = sbr.rel (%p321) target = $region44
        $region43: #{tpu_custom_call.1} parent=31 // pred_region
          %s324 = smul.u32 2, %s21
          %s326 = ssub.s32 256, 256
          %327 = vsyncadd %s317, %s326
          %s328 = smul.addr %s324, 128
          %s329 = scalar_lea.hbm %s3, %s328
          %s330 = sshll.u32 %s320, 4
          %s331 = int_to_ptr.vmem [resolvable:$true] %s330
          %336 = dma.vmem_to_hbm [thread:$0]  %s331, 256, %s329, %s317, 128, 128, 8
        $region44: #{tpu_custom_call.1} parent=31 // pred_fallthru
          _
      $region32: #{tpu_custom_call.1} parent=5 // pred_fallthru
        _
      %p337 = scmp.le.s32.totalorder 2, %s16
      // Predicated region
      $region45: #{tpu_custom_call.1} parent=5 // pred_check
        %p338 = pneg %p337
      $region46: #{tpu_custom_call.1} parent=5 // pred_check_branch
        %340 = sbr.rel (%p338) target = $region48
      $region47: #{tpu_custom_call.1} parent=5 // pred_region
        %s341 = ssub.s32 %s16, 2
        // Predicated region
        $region49: #{tpu_custom_call.1} parent=47 // pred_check
          %p342 = pneg %p113
        $region50: #{tpu_custom_call.1} parent=47 // pred_check_branch
          %344 = sbr.rel (%p342) target = $region52
        $region51: #{tpu_custom_call.1} parent=47 // pred_region
          %s345 = sand.u32 %s98, 1
          %s346 = scalar_lea.sflag [#allocation4], %s345
          %s347 = sand.u32 %s98, 1
          %s348 = smul.addr %s347, 16
          %s349 = scalar_lea.vmem [#allocation7], %s348
          %350 = dma.done %s346, 256
        $region52: #{tpu_custom_call.1} parent=47 // pred_fallthru
          _
      $region48: #{tpu_custom_call.1} parent=5 // pred_fallthru
        _
    $region6: #{tpu_custom_call.1} parent=1 // loop_footer
      %s20 = sadd.s32 1, %s16
    $region7: #{tpu_custom_call.1} parent=1 // loop_footer_branch
      %15 = sbr.rel target = $region3
    $region8: #{tpu_custom_call.1} parent=1 // loop_exit
      _
    %351 = vsyncpa [#allocation3], 1
    %s352 = scalar_lea.sflag [#allocation3], 1
    %353 = vsyncpa %s352, 1
    %354 = vsyncpa [#allocation6], 1
    %355 = vsyncpa [#allocation4], 1
    %s356 = scalar_lea.sflag [#allocation4], 1
    %357 = vsyncpa %s356, 1

</llo_original>
